<compile_context>
chip_gen: v7x
topology: tpu7x:2x2x1
jax: 0.10.0
libtpu: 0.0.40
codegen_flags: <defaults>
</compile_context>

<pallas_src>
from functools import partial

import jax
import jax.numpy as jnp
from jax.experimental import pallas as pl
from jax.experimental.pallas import tpu as pltpu

_LANE = 128  # TPU lane width; the folded mode axis is padded to a multiple.


def _round_up(n, m):
    return ((n + m - 1) // m) * m


def _cdiv(a, b):
    return (a + b - 1) // b


# ----------------------------------------------------------------------------
# Tiling plan.
# ----------------------------------------------------------------------------
def _plan_tiles(B, T, F, Mp):
    """Choose (register chunk cb, batch tile tb, padded batch b_pad)."""
    # Register-resident accumulators: 2 planes of (F, cb, Mp) f32 <= ~16 vregs.
    cb = max(8, ((16 * 1024) // max(1, 2 * F * Mp)) // 8 * 8)
    b_pad = _round_up(B, 8)
    cb = min(cb, b_pad)
    b_pad = _round_up(b_pad, cb)

    # Batch tile: blocks big enough to amortize the ~0.35us per-grid-step
    # overhead, bounded by an explicit VMEM budget (act + out blocks are
    # double-buffered; weights are tiny and single-buffered).
    bytes_per_row = 4 * 2 * (T + F) * Mp          # f32, re+im, act row + out row
    budget = 40 * 1024 * 1024                     # headroom under the 48 MiB limit
    tb_max = max(cb, (budget // (2 * bytes_per_row)) // cb * cb)

    if b_pad <= tb_max:
        if b_pad >= 2 * cb:
            # Split into two grid steps so the "parallel" batch axis can feed
            # both TensorCores on v7x.
            tb = _round_up(_cdiv(b_pad, 2), cb)
        else:
            tb = b_pad
    else:
        n_blocks = _cdiv(b_pad, tb_max)
        tb = _round_up(_cdiv(b_pad, n_blocks), cb)
    b_pad = _round_up(b_pad, tb)
    return cb, tb, b_pad


# ----------------------------------------------------------------------------
# Pallas kernel.
#   a_ref : (2, T, TB, Mp)  activations, [0]=re [1]=im  (corners folded in Mp)
#   w_ref : (2, T, F,  Mp)  Koopman weights (grid-constant, single-buffered)
#   o_ref : (2, F, TB, Mp)  out[., f, b, m] = sum_t a[., t, b, m] * w[., t, f, m]
# ----------------------------------------------------------------------------
def _koopman_modes_kernel(a_ref, w_ref, o_ref, *, cb):
    T = w_ref.shape[1]
    F = w_ref.shape[2]
    TB = a_ref.shape[2]
    Mp = a_ref.shape[3]
    n_chunks = TB // cb

    def compute_chunk(off):
        # Register-resident accumulators for a cb-row (sublane-aligned) chunk.
        def t_step(t, carry):
            acc_r, acc_i = carry
            ar = a_ref[0, t, pl.ds(off, cb), :][None, :, :]   # (1, cb, Mp)
            ai = a_ref[1, t, pl.ds(off, cb), :][None, :, :]
            wr = w_ref[0, t][:, None, :]                      # (F, 1, Mp)
            wi = w_ref[1, t][:, None, :]
            acc_r = acc_r + (ar * wr - ai * wi)
            acc_i = acc_i + (ar * wi + ai * wr)
            return acc_r, acc_i

        zeros = jnp.zeros((F, cb, Mp), jnp.float32)
        acc_r, acc_i = jax.lax.fori_loop(
            0, T, t_step, (zeros, zeros),
            unroll=True if T <= 8 else 2)
        # Lane-dense (Mp % 128 == 0), sublane-aligned stores.
        o_ref[0, :, pl.ds(off, cb), :] = acc_r
        o_ref[1, :, pl.ds(off, cb), :] = acc_i

    if n_chunks == 1:
        compute_chunk(0)
    else:
        @pl.loop(0, n_chunks)
        def _(c):
            compute_chunk(pl.multiple_of(c * cb, 8))


def _koopman_modes_pallas(acts, w_packed, *, cb, tb, cost):
    _, T, B_pad, Mp = acts.shape
    F = w_packed.shape[2]
    assert B_pad % tb == 0 and tb % cb == 0
    grid = (B_pad // tb,)

    a_spec = pl.BlockSpec((2, T, tb, Mp), lambda i: (0, 0, i, 0))
    # Grid-constant weights: single-buffer (double-buffering buys nothing).
    w_spec = pl.BlockSpec((2, T, F, Mp), lambda i: (0, 0, 0, 0),
                          pipeline_mode=pl.Buffered(1))
    o_spec = pl.BlockSpec((2, F, tb, Mp), lambda i: (0, 0, i, 0))

    return pl.pallas_call(
        partial(_koopman_modes_kernel, cb=cb),
        out_shape=jax.ShapeDtypeStruct((2, F, B_pad, Mp), jnp.float32),
        grid=grid,
        in_specs=[a_spec, w_spec],
        out_specs=o_spec,
        compiler_params=pltpu.CompilerParams(
            dimension_semantics=("parallel",),       # megacore on v7x; harmless elsewhere
            vmem_limit_bytes=48 * 1024 * 1024),      # above 16/32/32 MiB scoped defaults
        cost_estimate=cost,
    )(acts, w_packed)


# ----------------------------------------------------------------------------
# Weight preparation (do ONCE, not per forward call): fold the two spectral
# corners along the mode axis (they share weights), split re/im to a leading
# axis, pad the folded mode axis to a lane multiple.
# ----------------------------------------------------------------------------
def prepare_koopman_weights(koopman_matrix):
    T, F, mx, my = koopman_matrix.shape
    M = mx * my
    Mc = 2 * M
    Mc_pad = _round_up(Mc, _LANE)
    w = koopman_matrix.reshape(T, F, M)
    w = jnp.concatenate([w, w], axis=-1)                      # same weights, both corners
    wp = jnp.stack([jnp.real(w), jnp.imag(w)], axis=0).astype(jnp.float32)
    if Mc_pad > Mc:
        wp = jnp.pad(wp, ((0, 0), (0, 0), (0, 0), (0, Mc_pad - Mc)))
    return wp                                                  # (2, T, F, Mc_pad)


# ----------------------------------------------------------------------------
# Full Koopman_Operator2D.forward
#   x        : (B, op_size, H, W) float32
#   w_packed : (2, T, F, Mc_pad) float32 from prepare_koopman_weights
# ----------------------------------------------------------------------------
def koopman_operator2d_forward(x, w_packed, modes_x, modes_y):
    B, C, H, W = x.shape
    _, T, F, Mc_pad = w_packed.shape
    M = modes_x * modes_y
    Mc = 2 * M
    if not (2 * modes_x <= H and modes_y <= W // 2 + 1):
        raise ValueError("modes_x/modes_y too large for the input spatial size")
    if C != T:
        raise ValueError("channel count must equal op_size")

    x_ft = jnp.fft.rfft2(x)                                    # (B, T, H, Wf) c64
    Wf = x_ft.shape[-1]

    # Gather both retained corners, fold them along the mode axis, split re/im
    # and transpose once: a single layout pass instead of four.
    top = x_ft[:, :, :modes_x, :modes_y].reshape(B, T, M)
    bot = x_ft[:, :, H - modes_x:, :modes_y].reshape(B, T, M)
    corners = jnp.transpose(jnp.concatenate([top, bot], axis=-1), (1, 0, 2))
    acts = jnp.stack([jnp.real(corners), jnp.imag(corners)], axis=0)
    acts = acts.astype(jnp.float32)                            # (2, T, B, 2M)

    cb, tb, b_pad = _plan_tiles(B, T, F, Mc_pad)
    acts = jnp.pad(acts, ((0, 0), (0, 0), (0, b_pad - B), (0, Mc_pad - Mc)))

    cost = pl.CostEstimate(                                    # true (unpadded) sizes
        flops=8 * B * F * Mc * T,
        transcendentals=0,
        bytes_accessed=4 * (2 * T * B * Mc + 2 * T * F * Mc + 2 * B * F * Mc))

    out = _koopman_modes_pallas(acts, w_packed, cb=cb, tb=tb, cost=cost)

    oc = (out[0, :, :B, :Mc] + 1j * out[1, :, :B, :Mc]).astype(jnp.complex64)
    oc = jnp.transpose(oc, (1, 0, 2))                          # (B, F, 2M)
    out_top = oc[..., :M].reshape(B, F, modes_x, modes_y)
    out_bot = oc[..., M:].reshape(B, F, modes_x, modes_y)

    # Assemble the (mostly zero) output spectrum with concat + pad instead of a
    # full-size zeros allocation plus two scatter passes.
    mid = jnp.zeros((B, F, H - 2 * modes_x, modes_y), jnp.complex64)
    out_ft = jnp.concatenate([out_top, mid, out_bot], axis=2)  # (B, F, H, modes_y)
    out_ft = jnp.pad(out_ft, ((0, 0), (0, 0), (0, 0), (0, Wf - modes_y)))

    return jnp.fft.irfft2(out_ft, s=(H, W))                    # (B, F, H, W) f32


# Pure-JAX reference of the whole forward, for correctness checking.
def _reference_forward(x, koopman_matrix, modes_x, modes_y):
    B, C, H, W = x.shape
    x_ft = jnp.fft.rfft2(x)
    Wf = x_ft.shape[-1]
    tm = lambda inp: jnp.einsum('btxy,tfxy->bfxy', inp, koopman_matrix)
    out_ft = jnp.zeros((B, koopman_matrix.shape[1], H, Wf), dtype=jnp.complex64)
    out_ft = out_ft.at[:, :, :modes_x, :modes_y].set(
        tm(x_ft[:, :, :modes_x, :modes_y]))
    out_ft = out_ft.at[:, :, H - modes_x:, :modes_y].set(
        tm(x_ft[:, :, -modes_x:, :modes_y]))
    return jnp.fft.irfft2(out_ft, s=(H, W))


if __name__ == "__main__":
    def run_case(key, B, op_size, H, W, modes_x, modes_y):
        kx, kwr, kwi = jax.random.split(key, 3)
        x = jax.random.normal(kx, (B, op_size, H, W), dtype=jnp.float32)
        # Deterministic init matching: scale * torch.rand(op, op, mx, my, cfloat)
        scale = 1.0 / (op_size * op_size)
        w_real = scale * jax.random.uniform(
            kwr, (op_size, op_size, modes_x, modes_y), dtype=jnp.float32)
        w_imag = scale * jax.random.uniform(
            kwi, (op_size, op_size, modes_x, modes_y), dtype=jnp.float32)
        koopman_matrix = (w_real + 1j * w_imag).astype(jnp.complex64)

        # Weights folded / split / padded once.
        w_packed = prepare_koopman_weights(koopman_matrix)

        fwd = jax.jit(partial(koopman_operator2d_forward,
                              modes_x=modes_x, modes_y=modes_y))
        out = jax.block_until_ready(fwd(x, w_packed))
        ref = jax.block_until_ready(
            _reference_forward(x, koopman_matrix, modes_x, modes_y))

        assert out.shape == (B, op_size, H, W)
        err = jnp.max(jnp.abs(out - ref))
        assert jnp.allclose(out, ref, rtol=1e-4, atol=2e-5), f"max abs err {err}"

    root = jax.random.PRNGKey(0)
    k1, k2 = jax.random.split(root)

    # Primary small case (shapes consistent with the module).
    run_case(k1, B=2, op_size=4, H=16, W=16, modes_x=6, modes_y=6)
    # Secondary case exercising the T > 8 loop path, batch padding, the
    # multi-chunk register accumulation loop and a grid of >= 2 blocks.
    run_case(k2, B=33, op_size=9, H=16, W=16, modes_x=5, modes_y=7)

    print("KERNEL_OK")
</pallas_src>

<mosaic_0001>
module attributes {stable_mosaic.version = 11 : i64} {
  func.func @_koopman_modes_kernel(%arg0: i32, %arg1: memref<2x4x8x128xf32, #tpu.memory_space<vmem>>, %arg2: memref<2x4x4x128xf32, #tpu.memory_space<vmem>>, %arg3: memref<2x4x8x128xf32, #tpu.memory_space<vmem>>) attributes {dimension_semantics = [#tpu.dimension_semantics<parallel>], iteration_bounds = array<i64: 1>, scalar_prefetch = 0 : i64, scratch_operands = 0 : i64, tpu.core_type = #tpu.core_type<tc>, window_params = [{transform_indices = @transform_0, window_bounds = array<i64: 2, 4, 8, 128>}, {pipeline_mode = #tpu.pipeline_mode<synchronous>, transform_indices = @transform_1, window_bounds = array<i64: 2, 4, 4, 128>}, {transform_indices = @transform_2, window_bounds = array<i64: 2, 4, 8, 128>}]} {
    %cst = arith.constant 0.000000e+00 : f32
    %0 = vector.broadcast %cst : f32 to vector<4x8x128xf32>
    %c0_i32 = arith.constant 0 : i32
    %c0 = arith.constant 0 : index
    %1 = arith.index_cast %c0_i32 : i32 to index
    %c0_0 = arith.constant 0 : index
    %c0_1 = arith.constant 0 : index
    %2 = vector.load %arg1[%c0, %1, %c0_0, %c0_1] : memref<2x4x8x128xf32, #tpu.memory_space<vmem>>, vector<1x1x8x128xf32>
    %3 = vector.shape_cast %2 : vector<1x1x8x128xf32> to vector<8x128xf32>
    %4 = vector.shape_cast %3 : vector<8x128xf32> to vector<1x8x128xf32>
    %c1 = arith.constant 1 : index
    %5 = arith.index_cast %c0_i32 : i32 to index
    %c0_2 = arith.constant 0 : index
    %c0_3 = arith.constant 0 : index
    %6 = vector.load %arg1[%c1, %5, %c0_2, %c0_3] : memref<2x4x8x128xf32, #tpu.memory_space<vmem>>, vector<1x1x8x128xf32>
    %7 = vector.shape_cast %6 : vector<1x1x8x128xf32> to vector<8x128xf32>
    %8 = vector.shape_cast %7 : vector<8x128xf32> to vector<1x8x128xf32>
    %c0_4 = arith.constant 0 : index
    %9 = arith.index_cast %c0_i32 : i32 to index
    %c0_5 = arith.constant 0 : index
    %c0_6 = arith.constant 0 : index
    %10 = vector.load %arg2[%c0_4, %9, %c0_5, %c0_6] : memref<2x4x4x128xf32, #tpu.memory_space<vmem>>, vector<1x1x4x128xf32>
    %11 = vector.shape_cast %10 : vector<1x1x4x128xf32> to vector<4x128xf32>
    %12 = vector.shape_cast %11 : vector<4x128xf32> to vector<4x1x128xf32>
    %c1_7 = arith.constant 1 : index
    %13 = arith.index_cast %c0_i32 : i32 to index
    %c0_8 = arith.constant 0 : index
    %c0_9 = arith.constant 0 : index
    %14 = vector.load %arg2[%c1_7, %13, %c0_8, %c0_9] : memref<2x4x4x128xf32, #tpu.memory_space<vmem>>, vector<1x1x4x128xf32>
    %15 = vector.shape_cast %14 : vector<1x1x4x128xf32> to vector<4x128xf32>
    %16 = vector.shape_cast %15 : vector<4x128xf32> to vector<4x1x128xf32>
    %17 = vector.broadcast %4 : vector<1x8x128xf32> to vector<4x8x128xf32>
    %18 = vector.broadcast %12 : vector<4x1x128xf32> to vector<4x8x128xf32>
    %19 = arith.mulf %17, %18 : vector<4x8x128xf32>
    %20 = vector.broadcast %8 : vector<1x8x128xf32> to vector<4x8x128xf32>
    %21 = vector.broadcast %16 : vector<4x1x128xf32> to vector<4x8x128xf32>
    %22 = arith.mulf %20, %21 : vector<4x8x128xf32>
    %23 = arith.subf %19, %22 : vector<4x8x128xf32>
    %24 = arith.addf %0, %23 : vector<4x8x128xf32>
    %25 = vector.broadcast %4 : vector<1x8x128xf32> to vector<4x8x128xf32>
    %26 = vector.broadcast %16 : vector<4x1x128xf32> to vector<4x8x128xf32>
    %27 = arith.mulf %25, %26 : vector<4x8x128xf32>
    %28 = vector.broadcast %8 : vector<1x8x128xf32> to vector<4x8x128xf32>
    %29 = vector.broadcast %12 : vector<4x1x128xf32> to vector<4x8x128xf32>
    %30 = arith.mulf %28, %29 : vector<4x8x128xf32>
    %31 = arith.addf %27, %30 : vector<4x8x128xf32>
    %32 = arith.addf %0, %31 : vector<4x8x128xf32>
    %c1_i32 = arith.constant 1 : i32
    %c0_10 = arith.constant 0 : index
    %33 = arith.index_cast %c1_i32 : i32 to index
    %c0_11 = arith.constant 0 : index
    %c0_12 = arith.constant 0 : index
    %34 = vector.load %arg1[%c0_10, %33, %c0_11, %c0_12] : memref<2x4x8x128xf32, #tpu.memory_space<vmem>>, vector<1x1x8x128xf32>
    %35 = vector.shape_cast %34 : vector<1x1x8x128xf32> to vector<8x128xf32>
    %36 = vector.shape_cast %35 : vector<8x128xf32> to vector<1x8x128xf32>
    %c1_13 = arith.constant 1 : index
    %37 = arith.index_cast %c1_i32 : i32 to index
    %c0_14 = arith.constant 0 : index
    %c0_15 = arith.constant 0 : index
    %38 = vector.load %arg1[%c1_13, %37, %c0_14, %c0_15] : memref<2x4x8x128xf32, #tpu.memory_space<vmem>>, vector<1x1x8x128xf32>
    %39 = vector.shape_cast %38 : vector<1x1x8x128xf32> to vector<8x128xf32>
    %40 = vector.shape_cast %39 : vector<8x128xf32> to vector<1x8x128xf32>
    %c0_16 = arith.constant 0 : index
    %41 = arith.index_cast %c1_i32 : i32 to index
    %c0_17 = arith.constant 0 : index
    %c0_18 = arith.constant 0 : index
    %42 = vector.load %arg2[%c0_16, %41, %c0_17, %c0_18] : memref<2x4x4x128xf32, #tpu.memory_space<vmem>>, vector<1x1x4x128xf32>
    %43 = vector.shape_cast %42 : vector<1x1x4x128xf32> to vector<4x128xf32>
    %44 = vector.shape_cast %43 : vector<4x128xf32> to vector<4x1x128xf32>
    %c1_19 = arith.constant 1 : index
    %45 = arith.index_cast %c1_i32 : i32 to index
    %c0_20 = arith.constant 0 : index
    %c0_21 = arith.constant 0 : index
    %46 = vector.load %arg2[%c1_19, %45, %c0_20, %c0_21] : memref<2x4x4x128xf32, #tpu.memory_space<vmem>>, vector<1x1x4x128xf32>
    %47 = vector.shape_cast %46 : vector<1x1x4x128xf32> to vector<4x128xf32>
    %48 = vector.shape_cast %47 : vector<4x128xf32> to vector<4x1x128xf32>
    %49 = vector.broadcast %36 : vector<1x8x128xf32> to vector<4x8x128xf32>
    %50 = vector.broadcast %44 : vector<4x1x128xf32> to vector<4x8x128xf32>
    %51 = arith.mulf %49, %50 : vector<4x8x128xf32>
    %52 = vector.broadcast %40 : vector<1x8x128xf32> to vector<4x8x128xf32>
    %53 = vector.broadcast %48 : vector<4x1x128xf32> to vector<4x8x128xf32>
    %54 = arith.mulf %52, %53 : vector<4x8x128xf32>
    %55 = arith.subf %51, %54 : vector<4x8x128xf32>
    %56 = arith.addf %24, %55 : vector<4x8x128xf32>
    %57 = vector.broadcast %36 : vector<1x8x128xf32> to vector<4x8x128xf32>
    %58 = vector.broadcast %48 : vector<4x1x128xf32> to vector<4x8x128xf32>
    %59 = arith.mulf %57, %58 : vector<4x8x128xf32>
    %60 = vector.broadcast %40 : vector<1x8x128xf32> to vector<4x8x128xf32>
    %61 = vector.broadcast %44 : vector<4x1x128xf32> to vector<4x8x128xf32>
    %62 = arith.mulf %60, %61 : vector<4x8x128xf32>
    %63 = arith.addf %59, %62 : vector<4x8x128xf32>
    %64 = arith.addf %32, %63 : vector<4x8x128xf32>
    %c2_i32 = arith.constant 2 : i32
    %c0_22 = arith.constant 0 : index
    %65 = arith.index_cast %c2_i32 : i32 to index
    %c0_23 = arith.constant 0 : index
    %c0_24 = arith.constant 0 : index
    %66 = vector.load %arg1[%c0_22, %65, %c0_23, %c0_24] : memref<2x4x8x128xf32, #tpu.memory_space<vmem>>, vector<1x1x8x128xf32>
    %67 = vector.shape_cast %66 : vector<1x1x8x128xf32> to vector<8x128xf32>
    %68 = vector.shape_cast %67 : vector<8x128xf32> to vector<1x8x128xf32>
    %c1_25 = arith.constant 1 : index
    %69 = arith.index_cast %c2_i32 : i32 to index
    %c0_26 = arith.constant 0 : index
    %c0_27 = arith.constant 0 : index
    %70 = vector.load %arg1[%c1_25, %69, %c0_26, %c0_27] : memref<2x4x8x128xf32, #tpu.memory_space<vmem>>, vector<1x1x8x128xf32>
    %71 = vector.shape_cast %70 : vector<1x1x8x128xf32> to vector<8x128xf32>
    %72 = vector.shape_cast %71 : vector<8x128xf32> to vector<1x8x128xf32>
    %c0_28 = arith.constant 0 : index
    %73 = arith.index_cast %c2_i32 : i32 to index
    %c0_29 = arith.constant 0 : index
    %c0_30 = arith.constant 0 : index
    %74 = vector.load %arg2[%c0_28, %73, %c0_29, %c0_30] : memref<2x4x4x128xf32, #tpu.memory_space<vmem>>, vector<1x1x4x128xf32>
    %75 = vector.shape_cast %74 : vector<1x1x4x128xf32> to vector<4x128xf32>
    %76 = vector.shape_cast %75 : vector<4x128xf32> to vector<4x1x128xf32>
    %c1_31 = arith.constant 1 : index
    %77 = arith.index_cast %c2_i32 : i32 to index
    %c0_32 = arith.constant 0 : index
    %c0_33 = arith.constant 0 : index
    %78 = vector.load %arg2[%c1_31, %77, %c0_32, %c0_33] : memref<2x4x4x128xf32, #tpu.memory_space<vmem>>, vector<1x1x4x128xf32>
    %79 = vector.shape_cast %78 : vector<1x1x4x128xf32> to vector<4x128xf32>
    %80 = vector.shape_cast %79 : vector<4x128xf32> to vector<4x1x128xf32>
    %81 = vector.broadcast %68 : vector<1x8x128xf32> to vector<4x8x128xf32>
    %82 = vector.broadcast %76 : vector<4x1x128xf32> to vector<4x8x128xf32>
    %83 = arith.mulf %81, %82 : vector<4x8x128xf32>
    %84 = vector.broadcast %72 : vector<1x8x128xf32> to vector<4x8x128xf32>
    %85 = vector.broadcast %80 : vector<4x1x128xf32> to vector<4x8x128xf32>
    %86 = arith.mulf %84, %85 : vector<4x8x128xf32>
    %87 = arith.subf %83, %86 : vector<4x8x128xf32>
    %88 = arith.addf %56, %87 : vector<4x8x128xf32>
    %89 = vector.broadcast %68 : vector<1x8x128xf32> to vector<4x8x128xf32>
    %90 = vector.broadcast %80 : vector<4x1x128xf32> to vector<4x8x128xf32>
    %91 = arith.mulf %89, %90 : vector<4x8x128xf32>
    %92 = vector.broadcast %72 : vector<1x8x128xf32> to vector<4x8x128xf32>
    %93 = vector.broadcast %76 : vector<4x1x128xf32> to vector<4x8x128xf32>
    %94 = arith.mulf %92, %93 : vector<4x8x128xf32>
    %95 = arith.addf %91, %94 : vector<4x8x128xf32>
    %96 = arith.addf %64, %95 : vector<4x8x128xf32>
    %c3_i32 = arith.constant 3 : i32
    %c0_34 = arith.constant 0 : index
    %97 = arith.index_cast %c3_i32 : i32 to index
    %c0_35 = arith.constant 0 : index
    %c0_36 = arith.constant 0 : index
    %98 = vector.load %arg1[%c0_34, %97, %c0_35, %c0_36] : memref<2x4x8x128xf32, #tpu.memory_space<vmem>>, vector<1x1x8x128xf32>
    %99 = vector.shape_cast %98 : vector<1x1x8x128xf32> to vector<8x128xf32>
    %100 = vector.shape_cast %99 : vector<8x128xf32> to vector<1x8x128xf32>
    %c1_37 = arith.constant 1 : index
    %101 = arith.index_cast %c3_i32 : i32 to index
    %c0_38 = arith.constant 0 : index
    %c0_39 = arith.constant 0 : index
    %102 = vector.load %arg1[%c1_37, %101, %c0_38, %c0_39] : memref<2x4x8x128xf32, #tpu.memory_space<vmem>>, vector<1x1x8x128xf32>
    %103 = vector.shape_cast %102 : vector<1x1x8x128xf32> to vector<8x128xf32>
    %104 = vector.shape_cast %103 : vector<8x128xf32> to vector<1x8x128xf32>
    %c0_40 = arith.constant 0 : index
    %105 = arith.index_cast %c3_i32 : i32 to index
    %c0_41 = arith.constant 0 : index
    %c0_42 = arith.constant 0 : index
    %106 = vector.load %arg2[%c0_40, %105, %c0_41, %c0_42] : memref<2x4x4x128xf32, #tpu.memory_space<vmem>>, vector<1x1x4x128xf32>
    %107 = vector.shape_cast %106 : vector<1x1x4x128xf32> to vector<4x128xf32>
    %108 = vector.shape_cast %107 : vector<4x128xf32> to vector<4x1x128xf32>
    %c1_43 = arith.constant 1 : index
    %109 = arith.index_cast %c3_i32 : i32 to index
    %c0_44 = arith.constant 0 : index
    %c0_45 = arith.constant 0 : index
    %110 = vector.load %arg2[%c1_43, %109, %c0_44, %c0_45] : memref<2x4x4x128xf32, #tpu.memory_space<vmem>>, vector<1x1x4x128xf32>
    %111 = vector.shape_cast %110 : vector<1x1x4x128xf32> to vector<4x128xf32>
    %112 = vector.shape_cast %111 : vector<4x128xf32> to vector<4x1x128xf32>
    %113 = vector.broadcast %100 : vector<1x8x128xf32> to vector<4x8x128xf32>
    %114 = vector.broadcast %108 : vector<4x1x128xf32> to vector<4x8x128xf32>
    %115 = arith.mulf %113, %114 : vector<4x8x128xf32>
    %116 = vector.broadcast %104 : vector<1x8x128xf32> to vector<4x8x128xf32>
    %117 = vector.broadcast %112 : vector<4x1x128xf32> to vector<4x8x128xf32>
    %118 = arith.mulf %116, %117 : vector<4x8x128xf32>
    %119 = arith.subf %115, %118 : vector<4x8x128xf32>
    %120 = arith.addf %88, %119 : vector<4x8x128xf32>
    %121 = vector.broadcast %100 : vector<1x8x128xf32> to vector<4x8x128xf32>
    %122 = vector.broadcast %112 : vector<4x1x128xf32> to vector<4x8x128xf32>
    %123 = arith.mulf %121, %122 : vector<4x8x128xf32>
    %124 = vector.broadcast %104 : vector<1x8x128xf32> to vector<4x8x128xf32>
    %125 = vector.broadcast %108 : vector<4x1x128xf32> to vector<4x8x128xf32>
    %126 = arith.mulf %124, %125 : vector<4x8x128xf32>
    %127 = arith.addf %123, %126 : vector<4x8x128xf32>
    %128 = arith.addf %96, %127 : vector<4x8x128xf32>
    %c4_i32 = arith.constant 4 : i32
    %c0_46 = arith.constant 0 : index
    %c0_47 = arith.constant 0 : index
    %c0_48 = arith.constant 0 : index
    %c0_49 = arith.constant 0 : index
    %129 = vector.load %arg3[%c0_46, %c0_47, %c0_48, %c0_49] : memref<2x4x8x128xf32, #tpu.memory_space<vmem>>, vector<1x4x8x128xf32>
    %130 = vector.shape_cast %129 : vector<1x4x8x128xf32> to vector<4x8x128xf32>
    %131 = vector.shape_cast %120 : vector<4x8x128xf32> to vector<1x4x8x128xf32>
    tpu.vector_store %arg3[%c0_46, %c0_47, %c0_48, %c0_49], %131 {strides = array<i32>} : memref<2x4x8x128xf32, #tpu.memory_space<vmem>>, vector<1x4x8x128xf32>,
    %c1_50 = arith.constant 1 : index
    %c0_51 = arith.constant 0 : index
    %c0_52 = arith.constant 0 : index
    %c0_53 = arith.constant 0 : index
    %132 = vector.load %arg3[%c1_50, %c0_51, %c0_52, %c0_53] : memref<2x4x8x128xf32, #tpu.memory_space<vmem>>, vector<1x4x8x128xf32>
    %133 = vector.shape_cast %132 : vector<1x4x8x128xf32> to vector<4x8x128xf32>
    %134 = vector.shape_cast %128 : vector<4x8x128xf32> to vector<1x4x8x128xf32>
    tpu.vector_store %arg3[%c1_50, %c0_51, %c0_52, %c0_53], %134 {strides = array<i32>} : memref<2x4x8x128xf32, #tpu.memory_space<vmem>>, vector<1x4x8x128xf32>,
    return
  }
  func.func @transform_0(%arg0: i32) -> (i32, i32, i32, i32) {
    %c0_i32 = arith.constant 0 : i32
    %c0_i32_0 = arith.constant 0 : i32
    %c0_i32_1 = arith.constant 0 : i32
    %c0_i32_2 = arith.constant 0 : i32
    return %c0_i32, %c0_i32_0, %arg0, %c0_i32_1 : i32, i32, i32, i32
  }
  func.func @transform_1(%arg0: i32) -> (i32, i32, i32, i32) {
    %c0_i32 = arith.constant 0 : i32
    %c0_i32_0 = arith.constant 0 : i32
    %c0_i32_1 = arith.constant 0 : i32
    %c0_i32_2 = arith.constant 0 : i32
    %c0_i32_3 = arith.constant 0 : i32
    return %c0_i32, %c0_i32_0, %c0_i32_1, %c0_i32_2 : i32, i32, i32, i32
  }
  func.func @transform_2(%arg0: i32) -> (i32, i32, i32, i32) {
    %c0_i32 = arith.constant 0 : i32
    %c0_i32_0 = arith.constant 0 : i32
    %c0_i32_1 = arith.constant 0 : i32
    %c0_i32_2 = arith.constant 0 : i32
    return %c0_i32, %c0_i32_0, %arg0, %c0_i32_1 : i32, i32, i32, i32
  }
}

</mosaic_0001>

<llo_original>
// kernel: reverse.0
$region0: #{reverse.0}
  %s0 = inlined_call_operand.vmem [shape: f32[2,4,16,7], index: 0, kind: input, shape index: {}]
  %s1 = inlined_call_operand.vmem [shape: f32[2,4,16,7], index: 1, kind: output, shape index: {}]
  $region1: #{reverse.0} parent=0
    #allocation0 [shape = 'u8[65536]{0}', space=vmem, size = 0x10000, scoped, tag = 'operand span for operand 0']
    #allocation1 [shape = 'u8[32768]{0}', space=vmem, size = 0x8000, scoped, tag = 'operand span for operand 1']
    %s2 = scalar_lea.vmem [#allocation0], 8
    // Predicated region
    $region2: #{reverse.0} parent=1 // pred_check
      _
    $region3: #{reverse.0} parent=1 // pred_check_branch
      %4 = sbr.rel (0) target = $region5
    $region4: #{reverse.0} parent=1 // pred_region
      // Predicated region
      $region6: #{reverse.0} parent=4 // pred_check
        _
      $region7: #{reverse.0} parent=4 // pred_check_branch
        %6 = sbr.rel (0) target = $region9
      $region8: #{reverse.0} parent=4 // pred_region
        // Predicated region
        $region21: #{reverse.0} parent=8 // pred_check
          _
        $region22: #{reverse.0} parent=8 // pred_check_branch
          %35 = sbr.rel (0) target = $region24
        $region23: #{reverse.0} parent=8 // pred_region
          loop: start=0, step=1, limit=1
          $region25: #{reverse.0} parent=23 // loop_pre_header
            _
          $region26: #{reverse.0} parent=23 // loop_header
            %s37 = sphi 0, %s41
            %p38 = scmp.ge.s32.totalorder %s37, 1
            %s42 = sphi %s0, %s0
            %s43 = sphi %s2, %s2
          $region27: #{reverse.0} parent=23 // loop_header_branch
            %40 = sbr.rel (%p38) target = $region31
          $region28: #{reverse.0} parent=23 // loop_body
            %v44 = vld [vmem:[%s42] sm:$0xff]
            %45 = vst [vmem:[%s43] sm:$0xff] %v44
            %v46 = vld [vmem:[%s42 + $0x8] sm:$0xff]
            %47 = vst [vmem:[%s43 + $0x10] sm:$0xff] %v46
            %v48 = vld [vmem:[%s42 + $0x10] sm:$0xff]
            %49 = vst [vmem:[%s43 + $0x20] sm:$0xff] %v48
            %v50 = vld [vmem:[%s42 + $0x18] sm:$0xff]
            %51 = vst [vmem:[%s43 + $0x30] sm:$0xff] %v50
            %v52 = vld [vmem:[%s42 + $0x20] sm:$0xff]
            %53 = vst [vmem:[%s43 + $0x40] sm:$0xff] %v52
            %v54 = vld [vmem:[%s42 + $0x28] sm:$0xff]
            %55 = vst [vmem:[%s43 + $0x50] sm:$0xff] %v54
            %v56 = vld [vmem:[%s42 + $0x30] sm:$0xff]
            %57 = vst [vmem:[%s43 + $0x60] sm:$0xff] %v56
            %v58 = vld [vmem:[%s42 + $0x38] sm:$0xff]
            %59 = vst [vmem:[%s43 + $0x70] sm:$0xff] %v58
          $region29: #{reverse.0} parent=23 // loop_footer
            %s41 = sadd.s32 1, %s37
          $region30: #{reverse.0} parent=23 // loop_footer_branch
            %36 = sbr.rel target = $region26
          $region31: #{reverse.0} parent=23 // loop_exit
            _
        $region24: #{reverse.0} parent=8 // pred_fallthru
          _
        // Predicated region
        $region32: #{reverse.0} parent=8 // pred_check
          _
        $region33: #{reverse.0} parent=8 // pred_check_branch
          %61 = sbr.rel target = $region35
        $region34: #{reverse.0} parent=8 // pred_region
          _
        $region35: #{reverse.0} parent=8 // pred_fallthru
          _
      $region9: #{reverse.0} parent=4 // pred_fallthru
        _
      // Predicated region
      $region10: #{reverse.0} parent=4 // pred_check
        _
      $region11: #{reverse.0} parent=4 // pred_check_branch
        %8 = sbr.rel target = $region13
      $region12: #{reverse.0} parent=4 // pred_region
        loop: start=0, step=1, limit=1
        $region14: #{reverse.0} parent=12 // loop_pre_header
          _
        $region15: #{reverse.0} parent=12 // loop_header
          %s11 = sphi 0, %s15
          %p12 = scmp.ge.s32.totalorder %s11, 1
          %s16 = sphi %s0, %s0
          %s17 = sphi %s2, %s2
        $region16: #{reverse.0} parent=12 // loop_header_branch
          %14 = sbr.rel (%p12) target = $region20
        $region17: #{reverse.0} parent=12 // loop_body
          %v18 = vld [vmem:[%s16] sm:$0xff]
          %19 = vst [vmem:[%s17] sm:$0xff] %v18
          %v20 = vld [vmem:[%s16 + $0x8] sm:$0xff]
          %21 = vst [vmem:[%s17 + $0x10] sm:$0xff] %v20
          %v22 = vld [vmem:[%s16 + $0x10] sm:$0xff]
          %23 = vst [vmem:[%s17 + $0x20] sm:$0xff] %v22
          %v24 = vld [vmem:[%s16 + $0x18] sm:$0xff]
          %25 = vst [vmem:[%s17 + $0x30] sm:$0xff] %v24
          %v26 = vld [vmem:[%s16 + $0x20] sm:$0xff]
          %27 = vst [vmem:[%s17 + $0x40] sm:$0xff] %v26
          %v28 = vld [vmem:[%s16 + $0x28] sm:$0xff]
          %29 = vst [vmem:[%s17 + $0x50] sm:$0xff] %v28
          %v30 = vld [vmem:[%s16 + $0x30] sm:$0xff]
          %31 = vst [vmem:[%s17 + $0x60] sm:$0xff] %v30
          %v32 = vld [vmem:[%s16 + $0x38] sm:$0xff]
          %33 = vst [vmem:[%s17 + $0x70] sm:$0xff] %v32
        $region18: #{reverse.0} parent=12 // loop_footer
          %s15 = sadd.s32 1, %s11
        $region19: #{reverse.0} parent=12 // loop_footer_branch
          %10 = sbr.rel target = $region15
        $region20: #{reverse.0} parent=12 // loop_exit
          _
      $region13: #{reverse.0} parent=4 // pred_fallthru
        _
    $region5: #{reverse.0} parent=1 // pred_fallthru
      _
    %62 = vnop
    %s63 = scalar_lea.vmem [#allocation0], 7
    %v64 = vld [vmem:[%s63] ss:$-1 sm:$0xff]
    %v65 = vrot.slane %v64, 1
    %66 = vst [vmem:[#allocation1] sm:$0xff] %v65
    %s67 = scalar_lea.vmem [#allocation0], 8
    %s68 = scalar_lea.vmem %s67, 7 [#allocation0]
    %v69 = vld [vmem:[%s68] ss:$-1 sm:$0xff]
    %v70 = vrot.slane %v69, 1
    %v71 = vlaneseq
    %v72 = vshrl.u32 %v71, 7
    %vm73 = vcmp.lt.s32.totalorder %v72, 7
    %74 = vst.msk [vmem:[#allocation1] sm:$0xff] %vm73, %v70
    %s75 = scalar_lea.vmem [#allocation1], 8
    %s76 = scalar_lea.vmem [#allocation0], 16
    %s77 = scalar_lea.vmem %s76, 7 [#allocation0]
    %v78 = vld [vmem:[%s77] ss:$-1 sm:$0xff]
    %v79 = vrot.slane %v78, 1
    %80 = vst [vmem:[%s75] sm:$0xff] %v79
    %s81 = scalar_lea.vmem %s76, 8 [#allocation0]
    %s82 = scalar_lea.vmem %s81, 7 [#allocation0]
    %v83 = vld [vmem:[%s82] ss:$-1 sm:$0xff]
    %v84 = vrot.slane %v83, 1
    %v85 = vlaneseq
    %v86 = vshrl.u32 %v85, 7
    %vm87 = vcmp.lt.s32.totalorder %v86, 7
    %88 = vst.msk [vmem:[%s75] sm:$0xff] %vm87, %v84
    %s89 = scalar_lea.vmem [#allocation1], 16
    %s90 = scalar_lea.vmem [#allocation0], 32
    %s91 = scalar_lea.vmem %s90, 7 [#allocation0]
    %v92 = vld [vmem:[%s91] ss:$-1 sm:$0xff]
    %v93 = vrot.slane %v92, 1
    %94 = vst [vmem:[%s89] sm:$0xff] %v93
    %s95 = scalar_lea.vmem %s90, 8 [#allocation0]
    %s96 = scalar_lea.vmem %s95, 7 [#allocation0]
    %v97 = vld [vmem:[%s96] ss:$-1 sm:$0xff]
    %v98 = vrot.slane %v97, 1
    %v99 = vlaneseq
    %v100 = vshrl.u32 %v99, 7
    %vm101 = vcmp.lt.s32.totalorder %v100, 7
    %102 = vst.msk [vmem:[%s89] sm:$0xff] %vm101, %v98
    %s103 = scalar_lea.vmem [#allocation1], 24
    %s104 = scalar_lea.vmem [#allocation0], 48
    %s105 = scalar_lea.vmem %s104, 7 [#allocation0]
    %v106 = vld [vmem:[%s105] ss:$-1 sm:$0xff]
    %v107 = vrot.slane %v106, 1
    %108 = vst [vmem:[%s103] sm:$0xff] %v107
    %s109 = scalar_lea.vmem %s104, 8 [#allocation0]
    %s110 = scalar_lea.vmem %s109, 7 [#allocation0]
    %v111 = vld [vmem:[%s110] ss:$-1 sm:$0xff]
    %v112 = vrot.slane %v111, 1
    %v113 = vlaneseq
    %v114 = vshrl.u32 %v113, 7
    %vm115 = vcmp.lt.s32.totalorder %v114, 7
    %116 = vst.msk [vmem:[%s103] sm:$0xff] %vm115, %v112
    %s117 = scalar_lea.vmem [#allocation1], 32
    %s118 = scalar_lea.vmem [#allocation0], 64
    %s119 = scalar_lea.vmem %s118, 7 [#allocation0]
    %v120 = vld [vmem:[%s119] ss:$-1 sm:$0xff]
    %v121 = vrot.slane %v120, 1
    %122 = vst [vmem:[%s117] sm:$0xff] %v121
    %s123 = scalar_lea.vmem %s118, 8 [#allocation0]
    %s124 = scalar_lea.vmem %s123, 7 [#allocation0]
    %v125 = vld [vmem:[%s124] ss:$-1 sm:$0xff]
    %v126 = vrot.slane %v125, 1
    %v127 = vlaneseq
    %v128 = vshrl.u32 %v127, 7
    %vm129 = vcmp.lt.s32.totalorder %v128, 7
    %130 = vst.msk [vmem:[%s117] sm:$0xff] %vm129, %v126
    %s131 = scalar_lea.vmem [#allocation1], 40
    %s132 = scalar_lea.vmem [#allocation0], 80
    %s133 = scalar_lea.vmem %s132, 7 [#allocation0]
    %v134 = vld [vmem:[%s133] ss:$-1 sm:$0xff]
    %v135 = vrot.slane %v134, 1
    %136 = vst [vmem:[%s131] sm:$0xff] %v135
    %s137 = scalar_lea.vmem %s132, 8 [#allocation0]
    %s138 = scalar_lea.vmem %s137, 7 [#allocation0]
    %v139 = vld [vmem:[%s138] ss:$-1 sm:$0xff]
    %v140 = vrot.slane %v139, 1
    %v141 = vlaneseq
    %v142 = vshrl.u32 %v141, 7
    %vm143 = vcmp.lt.s32.totalorder %v142, 7
    %144 = vst.msk [vmem:[%s131] sm:$0xff] %vm143, %v140
    %s145 = scalar_lea.vmem [#allocation1], 48
    %s146 = scalar_lea.vmem [#allocation0], 96
    %s147 = scalar_lea.vmem %s146, 7 [#allocation0]
    %v148 = vld [vmem:[%s147] ss:$-1 sm:$0xff]
    %v149 = vrot.slane %v148, 1
    %150 = vst [vmem:[%s145] sm:$0xff] %v149
    %s151 = scalar_lea.vmem %s146, 8 [#allocation0]
    %s152 = scalar_lea.vmem %s151, 7 [#allocation0]
    %v153 = vld [vmem:[%s152] ss:$-1 sm:$0xff]
    %v154 = vrot.slane %v153, 1
    %v155 = vlaneseq
    %v156 = vshrl.u32 %v155, 7
    %vm157 = vcmp.lt.s32.totalorder %v156, 7
    %158 = vst.msk [vmem:[%s145] sm:$0xff] %vm157, %v154
    %s159 = scalar_lea.vmem [#allocation1], 56
    %s160 = scalar_lea.vmem [#allocation0], 112
    %s161 = scalar_lea.vmem %s160, 7 [#allocation0]
    %v162 = vld [vmem:[%s161] ss:$-1 sm:$0xff]
    %v163 = vrot.slane %v162, 1
    %164 = vst [vmem:[%s159] sm:$0xff] %v163
    %s165 = scalar_lea.vmem %s160, 8 [#allocation0]
    %s166 = scalar_lea.vmem %s165, 7 [#allocation0]
    %v167 = vld [vmem:[%s166] ss:$-1 sm:$0xff]
    %v168 = vrot.slane %v167, 1
    %v169 = vlaneseq
    %v170 = vshrl.u32 %v169, 7
    %vm171 = vcmp.lt.s32.totalorder %v170, 7
    %172 = vst.msk [vmem:[%s159] sm:$0xff] %vm171, %v168
    // Predicated region
    $region36: #{reverse.0} parent=1 // pred_check
      _
    $region37: #{reverse.0} parent=1 // pred_check_branch
      %174 = sbr.rel (0) target = $region39
    $region38: #{reverse.0} parent=1 // pred_region
      // Predicated region
      $region40: #{reverse.0} parent=38 // pred_check
        _
      $region41: #{reverse.0} parent=38 // pred_check_branch
        %176 = sbr.rel (0) target = $region43
      $region42: #{reverse.0} parent=38 // pred_region
        // Predicated region
        $region55: #{reverse.0} parent=42 // pred_check
          _
        $region56: #{reverse.0} parent=42 // pred_check_branch
          %205 = sbr.rel (0) target = $region58
        $region57: #{reverse.0} parent=42 // pred_region
          loop: start=0, step=1, limit=1
          $region59: #{reverse.0} parent=57 // loop_pre_header
            _
          $region60: #{reverse.0} parent=57 // loop_header
            %s207 = sphi 0, %s211
            %p208 = scmp.ge.s32.totalorder %s207, 1
            %s212 = sphi [#allocation1], [#allocation1]
            %s213 = sphi %s1, %s1
          $region61: #{reverse.0} parent=57 // loop_header_branch
            %210 = sbr.rel (%p208) target = $region65
          $region62: #{reverse.0} parent=57 // loop_body
            %v214 = vld [vmem:[%s212] sm:$0xff]
            %215 = vst [vmem:[%s213] sm:$0xff] %v214
            %v216 = vld [vmem:[%s212 + $0x8] sm:$0xff]
            %217 = vst [vmem:[%s213 + $0x8] sm:$0xff] %v216
            %v218 = vld [vmem:[%s212 + $0x10] sm:$0xff]
            %219 = vst [vmem:[%s213 + $0x10] sm:$0xff] %v218
            %v220 = vld [vmem:[%s212 + $0x18] sm:$0xff]
            %221 = vst [vmem:[%s213 + $0x18] sm:$0xff] %v220
            %v222 = vld [vmem:[%s212 + $0x20] sm:$0xff]
            %223 = vst [vmem:[%s213 + $0x20] sm:$0xff] %v222
            %v224 = vld [vmem:[%s212 + $0x28] sm:$0xff]
            %225 = vst [vmem:[%s213 + $0x28] sm:$0xff] %v224
            %v226 = vld [vmem:[%s212 + $0x30] sm:$0xff]
            %227 = vst [vmem:[%s213 + $0x30] sm:$0xff] %v226
            %v228 = vld [vmem:[%s212 + $0x38] sm:$0xff]
            %229 = vst [vmem:[%s213 + $0x38] sm:$0xff] %v228
          $region63: #{reverse.0} parent=57 // loop_footer
            %s211 = sadd.s32 1, %s207
          $region64: #{reverse.0} parent=57 // loop_footer_branch
            %206 = sbr.rel target = $region60
          $region65: #{reverse.0} parent=57 // loop_exit
            _
        $region58: #{reverse.0} parent=42 // pred_fallthru
          _
        // Predicated region
        $region66: #{reverse.0} parent=42 // pred_check
          _
        $region67: #{reverse.0} parent=42 // pred_check_branch
          %231 = sbr.rel target = $region69
        $region68: #{reverse.0} parent=42 // pred_region
          _
        $region69: #{reverse.0} parent=42 // pred_fallthru
          _
      $region43: #{reverse.0} parent=38 // pred_fallthru
        _
      // Predicated region
      $region44: #{reverse.0} parent=38 // pred_check
        _
      $region45: #{reverse.0} parent=38 // pred_check_branch
        %178 = sbr.rel target = $region47
      $region46: #{reverse.0} parent=38 // pred_region
        loop: start=0, step=1, limit=1
        $region48: #{reverse.0} parent=46 // loop_pre_header
          _
        $region49: #{reverse.0} parent=46 // loop_header
          %s181 = sphi 0, %s185
          %p182 = scmp.ge.s32.totalorder %s181, 1
          %s186 = sphi [#allocation1], [#allocation1]
          %s187 = sphi %s1, %s1
        $region50: #{reverse.0} parent=46 // loop_header_branch
          %184 = sbr.rel (%p182) target = $region54
        $region51: #{reverse.0} parent=46 // loop_body
          %v188 = vld [vmem:[%s186] sm:$0xff]
          %189 = vst [vmem:[%s187] sm:$0xff] %v188
          %v190 = vld [vmem:[%s186 + $0x8] sm:$0xff]
          %191 = vst [vmem:[%s187 + $0x8] sm:$0xff] %v190
          %v192 = vld [vmem:[%s186 + $0x10] sm:$0xff]
          %193 = vst [vmem:[%s187 + $0x10] sm:$0xff] %v192
          %v194 = vld [vmem:[%s186 + $0x18] sm:$0xff]
          %195 = vst [vmem:[%s187 + $0x18] sm:$0xff] %v194
          %v196 = vld [vmem:[%s186 + $0x20] sm:$0xff]
          %197 = vst [vmem:[%s187 + $0x20] sm:$0xff] %v196
          %v198 = vld [vmem:[%s186 + $0x28] sm:$0xff]
          %199 = vst [vmem:[%s187 + $0x28] sm:$0xff] %v198
          %v200 = vld [vmem:[%s186 + $0x30] sm:$0xff]
          %201 = vst [vmem:[%s187 + $0x30] sm:$0xff] %v200
          %v202 = vld [vmem:[%s186 + $0x38] sm:$0xff]
          %203 = vst [vmem:[%s187 + $0x38] sm:$0xff] %v202
        $region52: #{reverse.0} parent=46 // loop_footer
          %s185 = sadd.s32 1, %s181
        $region53: #{reverse.0} parent=46 // loop_footer_branch
          %180 = sbr.rel target = $region49
        $region54: #{reverse.0} parent=46 // loop_exit
          _
      $region47: #{reverse.0} parent=38 // pred_fallthru
        _
    $region39: #{reverse.0} parent=1 // pred_fallthru
      _
    %232 = vnop

// kernel: koopman_operator2d_forward.1
$region0: #{koopman_operator2d_forward.1}
  #allocation0 [shape = 'u32[]', space=smem, size = 0x4, offset = 0x4, fixed_abs, tag = 'smem constant byte address 0x4 - core index']
  #allocation1 [shape = 'u32[144,128]{1,0:T(1,128)}', space=vmem, size = 0x12000, scoped, tag = 'internal scratch']
  %s0 = inlined_call_operand.vmem [shape: f32[2,4,8,128], index: 0, kind: input, shape index: {}]
  %s1 = inlined_call_operand.vmem [shape: f32[2,4,4,128], index: 1, kind: input, shape index: {}]
  %s2 = inlined_call_operand.vmem [shape: f32[2,4,8,128], index: 2, kind: output, shape index: {}]
  %s3 = sld [smem:[#allocation0]]
  $region18: #{koopman_operator2d_forward.1} parent=0
    _
  %s5 = ssub.s32 1, %s3
  %s6 = scalar_select 0, %s5, %s3
  // Predicated region
  $region2: #{koopman_operator2d_forward.1} parent=0 // pred_check
    _
  $region3: #{koopman_operator2d_forward.1} parent=0 // pred_check_branch
    %8 = sbr.rel (0) target = $region5
  $region4: #{koopman_operator2d_forward.1} parent=0 // pred_region
    _
  $region5: #{koopman_operator2d_forward.1} parent=0 // pred_fallthru
    _
  // Predicated region
  $region6: #{koopman_operator2d_forward.1} parent=0 // pred_check
    _
  $region7: #{koopman_operator2d_forward.1} parent=0 // pred_check_branch
    %10 = sbr.rel (0) target = $region9
  $region8: #{koopman_operator2d_forward.1} parent=0 // pred_region
    _
  $region9: #{koopman_operator2d_forward.1} parent=0 // pred_fallthru
    _
  %v11 = vld [vmem:[%s0] sm:$0xff]
  %s12 = scalar_lea.vmem %s0, 32
  %v13 = vld [vmem:[%s12] sm:$0xff]
  %v14 = vld [vmem:[%s1] sm:$0xf]
  %v17 = vunpack.c.l.s4 1966171168
  %v18 = vunpack.c.0.s8 %v17
  %v19 = vlaneseq
  %v20 = vshrl.u32 %v19, 7
  %v21 = vsub.s32 %v18, %v20
  %v22 = vrot.slane %v14, %v21
  %v23 = vcombine.high %v22, %v22
  %v25 = vunpack.c.l.s4 1966171168
  %v26 = vunpack.c.0.s8 %v25
  %v27 = vlaneseq
  %v28 = vshrl.u32 %v27, 7
  %v29 = vsub.s32 %v26, %v28
  %v30 = vrot.slane %v22, %v29
  %v32 = vunpack.c.l.s4 1966171168
  %v33 = vunpack.c.0.s8 %v32
  %v34 = vlaneseq
  %v35 = vshrl.u32 %v34, 7
  %v36 = vsub.s32 %v33, %v35
  %v37 = vrot.slane %v23, %v36
  %v38 = vcombine.high %v30, %v30
  %v39 = vcombine.high %v37, %v37
  %s40 = scalar_lea.vmem %s1, 16
  %v41 = vld [vmem:[%s40] sm:$0xf]
  %v44 = vunpack.c.l.s4 1966171168
  %v45 = vunpack.c.0.s8 %v44
  %v46 = vlaneseq
  %v47 = vshrl.u32 %v46, 7
  %v48 = vsub.s32 %v45, %v47
  %v49 = vrot.slane %v41, %v48
  %v50 = vcombine.high %v49, %v49
  %v52 = vunpack.c.l.s4 1966171168
  %v53 = vunpack.c.0.s8 %v52
  %v54 = vlaneseq
  %v55 = vshrl.u32 %v54, 7
  %v56 = vsub.s32 %v53, %v55
  %v57 = vrot.slane %v49, %v56
  %v59 = vunpack.c.l.s4 1966171168
  %v60 = vunpack.c.0.s8 %v59
  %v61 = vlaneseq
  %v62 = vshrl.u32 %v61, 7
  %v63 = vsub.s32 %v60, %v62
  %v64 = vrot.slane %v50, %v63
  %v65 = vcombine.high %v57, %v57
  %v66 = vcombine.high %v64, %v64
  %v67 = vlaneseq
  %v68 = vshrl.u32 %v67, 7
  %v69 = vsub.s32 0, %v68
  %v70 = vrot.slane %v30, %v69
  %v71 = vlaneseq
  %v72 = vshrl.u32 %v71, 7
  %v73 = vsub.s32 0, %v72
  %v74 = vrot.slane %v37, %v73
  %v75 = vlaneseq
  %v76 = vshrl.u32 %v75, 7
  %v77 = vsub.s32 0, %v76
  %v78 = vrot.slane %v38, %v77
  %v79 = vlaneseq
  %v80 = vshrl.u32 %v79, 7
  %v81 = vsub.s32 0, %v80
  %v82 = vrot.slane %v39, %v81
  %v87 = vmul.f32 %v11, %v70
  %v88 = vmul.f32 %v11, %v74
  %v89 = vmul.f32 %v11, %v78
  %v90 = vmul.f32 %v11, %v82
  %v91 = vlaneseq
  %v92 = vshrl.u32 %v91, 7
  %v93 = vsub.s32 0, %v92
  %v94 = vrot.slane %v57, %v93
  %v95 = vlaneseq
  %v96 = vshrl.u32 %v95, 7
  %v97 = vsub.s32 0, %v96
  %v98 = vrot.slane %v64, %v97
  %v99 = vlaneseq
  %v100 = vshrl.u32 %v99, 7
  %v101 = vsub.s32 0, %v100
  %v102 = vrot.slane %v65, %v101
  %v103 = vlaneseq
  %v104 = vshrl.u32 %v103, 7
  %v105 = vsub.s32 0, %v104
  %v106 = vrot.slane %v66, %v105
  %v111 = vmul.f32 %v13, %v94
  %v112 = vmul.f32 %v13, %v98
  %v113 = vmul.f32 %v13, %v102
  %v114 = vmul.f32 %v13, %v106
  %v115 = vsub.f32 %v87, %v111
  %v116 = vsub.f32 %v88, %v112
  %v117 = vsub.f32 %v89, %v113
  %v118 = vsub.f32 %v90, %v114
  %v119 = vadd.f32 %v115, 0.0
  %v120 = vadd.f32 %v116, 0.0
  %v121 = vadd.f32 %v117, 0.0
  %v122 = vadd.f32 %v118, 0.0
  %v123 = vmul.f32 %v11, %v94
  %v124 = vmul.f32 %v11, %v98
  %v125 = vmul.f32 %v11, %v102
  %v126 = vmul.f32 %v11, %v106
  %v127 = vmul.f32 %v13, %v70
  %v128 = vmul.f32 %v13, %v74
  %v129 = vmul.f32 %v13, %v78
  %v130 = vmul.f32 %v13, %v82
  %v131 = vadd.f32 %v123, %v127
  %v132 = vadd.f32 %v124, %v128
  %v133 = vadd.f32 %v125, %v129
  %v134 = vadd.f32 %v126, %v130
  %v135 = vadd.f32 %v131, 0.0
  %v136 = vadd.f32 %v132, 0.0
  %v137 = vadd.f32 %v133, 0.0
  %v138 = vadd.f32 %v134, 0.0
  %s139 = scalar_lea.vmem %s0, 8
  %v140 = vld [vmem:[%s139] sm:$0xff]
  %s141 = scalar_lea.vmem %s0, 40
  %v142 = vld [vmem:[%s141] sm:$0xff]
  %s143 = scalar_lea.vmem %s1, 4
  %v144 = vld [vmem:[%s143] sm:$0xf]
  %v147 = vunpack.c.l.s4 1966171168
  %v148 = vunpack.c.0.s8 %v147
  %v149 = vlaneseq
  %v150 = vshrl.u32 %v149, 7
  %v151 = vsub.s32 %v148, %v150
  %v152 = vrot.slane %v144, %v151
  %v153 = vcombine.high %v152, %v152
  %v155 = vunpack.c.l.s4 1966171168
  %v156 = vunpack.c.0.s8 %v155
  %v157 = vlaneseq
  %v158 = vshrl.u32 %v157, 7
  %v159 = vsub.s32 %v156, %v158
  %v160 = vrot.slane %v152, %v159
  %v162 = vunpack.c.l.s4 1966171168
  %v163 = vunpack.c.0.s8 %v162
  %v164 = vlaneseq
  %v165 = vshrl.u32 %v164, 7
  %v166 = vsub.s32 %v163, %v165
  %v167 = vrot.slane %v153, %v166
  %v168 = vcombine.high %v160, %v160
  %v169 = vcombine.high %v167, %v167
  %s170 = scalar_lea.vmem %s1, 20
  %v171 = vld [vmem:[%s170] sm:$0xf]
  %v174 = vunpack.c.l.s4 1966171168
  %v175 = vunpack.c.0.s8 %v174
  %v176 = vlaneseq
  %v177 = vshrl.u32 %v176, 7
  %v178 = vsub.s32 %v175, %v177
  %v179 = vrot.slane %v171, %v178
  %v180 = vcombine.high %v179, %v179
  %v182 = vunpack.c.l.s4 1966171168
  %v183 = vunpack.c.0.s8 %v182
  %v184 = vlaneseq
  %v185 = vshrl.u32 %v184, 7
  %v186 = vsub.s32 %v183, %v185
  %v187 = vrot.slane %v179, %v186
  %v189 = vunpack.c.l.s4 1966171168
  %v190 = vunpack.c.0.s8 %v189
  %v191 = vlaneseq
  %v192 = vshrl.u32 %v191, 7
  %v193 = vsub.s32 %v190, %v192
  %v194 = vrot.slane %v180, %v193
  %v195 = vcombine.high %v187, %v187
  %v196 = vcombine.high %v194, %v194
  %v197 = vlaneseq
  %v198 = vshrl.u32 %v197, 7
  %v199 = vsub.s32 0, %v198
  %v200 = vrot.slane %v160, %v199
  %v201 = vlaneseq
  %v202 = vshrl.u32 %v201, 7
  %v203 = vsub.s32 0, %v202
  %v204 = vrot.slane %v167, %v203
  %v205 = vlaneseq
  %v206 = vshrl.u32 %v205, 7
  %v207 = vsub.s32 0, %v206
  %v208 = vrot.slane %v168, %v207
  %v209 = vlaneseq
  %v210 = vshrl.u32 %v209, 7
  %v211 = vsub.s32 0, %v210
  %v212 = vrot.slane %v169, %v211
  %v217 = vmul.f32 %v140, %v200
  %v218 = vmul.f32 %v140, %v204
  %v219 = vmul.f32 %v140, %v208
  %v220 = vmul.f32 %v140, %v212
  %v221 = vlaneseq
  %v222 = vshrl.u32 %v221, 7
  %v223 = vsub.s32 0, %v222
  %v224 = vrot.slane %v187, %v223
  %v225 = vlaneseq
  %v226 = vshrl.u32 %v225, 7
  %v227 = vsub.s32 0, %v226
  %v228 = vrot.slane %v194, %v227
  %v229 = vlaneseq
  %v230 = vshrl.u32 %v229, 7
  %v231 = vsub.s32 0, %v230
  %v232 = vrot.slane %v195, %v231
  %v233 = vlaneseq
  %v234 = vshrl.u32 %v233, 7
  %v235 = vsub.s32 0, %v234
  %v236 = vrot.slane %v196, %v235
  %v241 = vmul.f32 %v142, %v224
  %v242 = vmul.f32 %v142, %v228
  %v243 = vmul.f32 %v142, %v232
  %v244 = vmul.f32 %v142, %v236
  %v245 = vsub.f32 %v217, %v241
  %v246 = vsub.f32 %v218, %v242
  %v247 = vsub.f32 %v219, %v243
  %v248 = vsub.f32 %v220, %v244
  %v249 = vadd.f32 %v119, %v245
  %v250 = vadd.f32 %v120, %v246
  %v251 = vadd.f32 %v121, %v247
  %v252 = vadd.f32 %v122, %v248
  %v253 = vmul.f32 %v140, %v224
  %v254 = vmul.f32 %v140, %v228
  %v255 = vmul.f32 %v140, %v232
  %v256 = vmul.f32 %v140, %v236
  %v257 = vmul.f32 %v142, %v200
  %v258 = vmul.f32 %v142, %v204
  %v259 = vmul.f32 %v142, %v208
  %v260 = vmul.f32 %v142, %v212
  %v261 = vadd.f32 %v253, %v257
  %v262 = vadd.f32 %v254, %v258
  %v263 = vadd.f32 %v255, %v259
  %v264 = vadd.f32 %v256, %v260
  %v265 = vadd.f32 %v135, %v261
  %v266 = vadd.f32 %v136, %v262
  %v267 = vadd.f32 %v137, %v263
  %v268 = vadd.f32 %v138, %v264
  %s269 = scalar_lea.vmem %s0, 16
  %v270 = vld [vmem:[%s269] sm:$0xff]
  %s271 = scalar_lea.vmem %s0, 48
  %v272 = vld [vmem:[%s271] sm:$0xff]
  %s273 = scalar_lea.vmem %s1, 8
  %v274 = vld [vmem:[%s273] sm:$0xf]
  %v277 = vunpack.c.l.s4 1966171168
  %v278 = vunpack.c.0.s8 %v277
  %v279 = vlaneseq
  %v280 = vshrl.u32 %v279, 7
  %v281 = vsub.s32 %v278, %v280
  %v282 = vrot.slane %v274, %v281
  %v283 = vcombine.high %v282, %v282
  %v285 = vunpack.c.l.s4 1966171168
  %v286 = vunpack.c.0.s8 %v285
  %v287 = vlaneseq
  %v288 = vshrl.u32 %v287, 7
  %v289 = vsub.s32 %v286, %v288
  %v290 = vrot.slane %v282, %v289
  %v292 = vunpack.c.l.s4 1966171168
  %v293 = vunpack.c.0.s8 %v292
  %v294 = vlaneseq
  %v295 = vshrl.u32 %v294, 7
  %v296 = vsub.s32 %v293, %v295
  %v297 = vrot.slane %v283, %v296
  %v298 = vcombine.high %v290, %v290
  %v299 = vcombine.high %v297, %v297
  %s300 = scalar_lea.vmem %s1, 24
  %v301 = vld [vmem:[%s300] sm:$0xf]
  %v304 = vunpack.c.l.s4 1966171168
  %v305 = vunpack.c.0.s8 %v304
  %v306 = vlaneseq
  %v307 = vshrl.u32 %v306, 7
  %v308 = vsub.s32 %v305, %v307
  %v309 = vrot.slane %v301, %v308
  %v310 = vcombine.high %v309, %v309
  %v312 = vunpack.c.l.s4 1966171168
  %v313 = vunpack.c.0.s8 %v312
  %v314 = vlaneseq
  %v315 = vshrl.u32 %v314, 7
  %v316 = vsub.s32 %v313, %v315
  %v317 = vrot.slane %v309, %v316
  %v319 = vunpack.c.l.s4 1966171168
  %v320 = vunpack.c.0.s8 %v319
  %v321 = vlaneseq
  %v322 = vshrl.u32 %v321, 7
  %v323 = vsub.s32 %v320, %v322
  %v324 = vrot.slane %v310, %v323
  %v325 = vcombine.high %v317, %v317
  %v326 = vcombine.high %v324, %v324
  %v327 = vlaneseq
  %v328 = vshrl.u32 %v327, 7
  %v329 = vsub.s32 0, %v328
  %v330 = vrot.slane %v290, %v329
  %v331 = vlaneseq
  %v332 = vshrl.u32 %v331, 7
  %v333 = vsub.s32 0, %v332
  %v334 = vrot.slane %v297, %v333
  %v335 = vlaneseq
  %v336 = vshrl.u32 %v335, 7
  %v337 = vsub.s32 0, %v336
  %v338 = vrot.slane %v298, %v337
  %v339 = vlaneseq
  %v340 = vshrl.u32 %v339, 7
  %v341 = vsub.s32 0, %v340
  %v342 = vrot.slane %v299, %v341
  %v347 = vmul.f32 %v270, %v330
  %v348 = vmul.f32 %v270, %v334
  %v349 = vmul.f32 %v270, %v338
  %v350 = vmul.f32 %v270, %v342
  %v351 = vlaneseq
  %v352 = vshrl.u32 %v351, 7
  %v353 = vsub.s32 0, %v352
  %v354 = vrot.slane %v317, %v353
  %v355 = vlaneseq
  %v356 = vshrl.u32 %v355, 7
  %v357 = vsub.s32 0, %v356
  %v358 = vrot.slane %v324, %v357
  %v359 = vlaneseq
  %v360 = vshrl.u32 %v359, 7
  %v361 = vsub.s32 0, %v360
  %v362 = vrot.slane %v325, %v361
  %v363 = vlaneseq
  %v364 = vshrl.u32 %v363, 7
  %v365 = vsub.s32 0, %v364
  %v366 = vrot.slane %v326, %v365
  %v371 = vmul.f32 %v272, %v354
  %v372 = vmul.f32 %v272, %v358
  %v373 = vmul.f32 %v272, %v362
  %v374 = vmul.f32 %v272, %v366
  %v375 = vsub.f32 %v347, %v371
  %v376 = vsub.f32 %v348, %v372
  %v377 = vsub.f32 %v349, %v373
  %v378 = vsub.f32 %v350, %v374
  %v379 = vadd.f32 %v249, %v375
  %v380 = vadd.f32 %v250, %v376
  %v381 = vadd.f32 %v251, %v377
  %v382 = vadd.f32 %v252, %v378
  %v383 = vmul.f32 %v270, %v354
  %v384 = vmul.f32 %v270, %v358
  %v385 = vmul.f32 %v270, %v362
  %v386 = vmul.f32 %v270, %v366
  %v387 = vmul.f32 %v272, %v330
  %v388 = vmul.f32 %v272, %v334
  %v389 = vmul.f32 %v272, %v338
  %v390 = vmul.f32 %v272, %v342
  %v391 = vadd.f32 %v383, %v387
  %v392 = vadd.f32 %v384, %v388
  %v393 = vadd.f32 %v385, %v389
  %v394 = vadd.f32 %v386, %v390
  %v395 = vadd.f32 %v265, %v391
  %v396 = vadd.f32 %v266, %v392
  %v397 = vadd.f32 %v267, %v393
  %v398 = vadd.f32 %v268, %v394
  %s399 = scalar_lea.vmem %s0, 24
  %v400 = vld [vmem:[%s399] sm:$0xff]
  %s401 = scalar_lea.vmem %s0, 56
  %v402 = vld [vmem:[%s401] sm:$0xff]
  %s403 = scalar_lea.vmem %s1, 12
  %v404 = vld [vmem:[%s403] sm:$0xf]
  %v407 = vunpack.c.l.s4 1966171168
  %v408 = vunpack.c.0.s8 %v407
  %v409 = vlaneseq
  %v410 = vshrl.u32 %v409, 7
  %v411 = vsub.s32 %v408, %v410
  %v412 = vrot.slane %v404, %v411
  %v413 = vcombine.high %v412, %v412
  %v415 = vunpack.c.l.s4 1966171168
  %v416 = vunpack.c.0.s8 %v415
  %v417 = vlaneseq
  %v418 = vshrl.u32 %v417, 7
  %v419 = vsub.s32 %v416, %v418
  %v420 = vrot.slane %v412, %v419
  %v422 = vunpack.c.l.s4 1966171168
  %v423 = vunpack.c.0.s8 %v422
  %v424 = vlaneseq
  %v425 = vshrl.u32 %v424, 7
  %v426 = vsub.s32 %v423, %v425
  %v427 = vrot.slane %v413, %v426
  %v428 = vcombine.high %v420, %v420
  %v429 = vcombine.high %v427, %v427
  %s430 = scalar_lea.vmem %s1, 28
  %v431 = vld [vmem:[%s430] sm:$0xf]
  %v434 = vunpack.c.l.s4 1966171168
  %v435 = vunpack.c.0.s8 %v434
  %v436 = vlaneseq
  %v437 = vshrl.u32 %v436, 7
  %v438 = vsub.s32 %v435, %v437
  %v439 = vrot.slane %v431, %v438
  %v440 = vcombine.high %v439, %v439
  %v442 = vunpack.c.l.s4 1966171168
  %v443 = vunpack.c.0.s8 %v442
  %v444 = vlaneseq
  %v445 = vshrl.u32 %v444, 7
  %v446 = vsub.s32 %v443, %v445
  %v447 = vrot.slane %v439, %v446
  %v449 = vunpack.c.l.s4 1966171168
  %v450 = vunpack.c.0.s8 %v449
  %v451 = vlaneseq
  %v452 = vshrl.u32 %v451, 7
  %v453 = vsub.s32 %v450, %v452
  %v454 = vrot.slane %v440, %v453
  %v455 = vcombine.high %v447, %v447
  %v456 = vcombine.high %v454, %v454
  %v457 = vlaneseq
  %v458 = vshrl.u32 %v457, 7
  %v459 = vsub.s32 0, %v458
  %v460 = vrot.slane %v420, %v459
  %v461 = vlaneseq
  %v462 = vshrl.u32 %v461, 7
  %v463 = vsub.s32 0, %v462
  %v464 = vrot.slane %v427, %v463
  %v465 = vlaneseq
  %v466 = vshrl.u32 %v465, 7
  %v467 = vsub.s32 0, %v466
  %v468 = vrot.slane %v428, %v467
  %v469 = vlaneseq
  %v470 = vshrl.u32 %v469, 7
  %v471 = vsub.s32 0, %v470
  %v472 = vrot.slane %v429, %v471
  %v477 = vmul.f32 %v400, %v460
  %v478 = vmul.f32 %v400, %v464
  %v479 = vmul.f32 %v400, %v468
  %v480 = vmul.f32 %v400, %v472
  %v481 = vlaneseq
  %v482 = vshrl.u32 %v481, 7
  %v483 = vsub.s32 0, %v482
  %v484 = vrot.slane %v447, %v483
  %v485 = vlaneseq
  %v486 = vshrl.u32 %v485, 7
  %v487 = vsub.s32 0, %v486
  %v488 = vrot.slane %v454, %v487
  %v489 = vlaneseq
  %v490 = vshrl.u32 %v489, 7
  %v491 = vsub.s32 0, %v490
  %v492 = vrot.slane %v455, %v491
  %v493 = vlaneseq
  %v494 = vshrl.u32 %v493, 7
  %v495 = vsub.s32 0, %v494
  %v496 = vrot.slane %v456, %v495
  %v501 = vmul.f32 %v402, %v484
  %v502 = vmul.f32 %v402, %v488
  %v503 = vmul.f32 %v402, %v492
  %v504 = vmul.f32 %v402, %v496
  %v505 = vsub.f32 %v477, %v501
  %v506 = vsub.f32 %v478, %v502
  %v507 = vsub.f32 %v479, %v503
  %v508 = vsub.f32 %v480, %v504
  %v509 = vadd.f32 %v379, %v505
  %v510 = vadd.f32 %v380, %v506
  %v511 = vadd.f32 %v381, %v507
  %v512 = vadd.f32 %v382, %v508
  %v513 = vmul.f32 %v400, %v484
  %v514 = vmul.f32 %v400, %v488
  %v515 = vmul.f32 %v400, %v492
  %v516 = vmul.f32 %v400, %v496
  %v517 = vmul.f32 %v402, %v460
  %v518 = vmul.f32 %v402, %v464
  %v519 = vmul.f32 %v402, %v468
  %v520 = vmul.f32 %v402, %v472
  %v521 = vadd.f32 %v513, %v517
  %v522 = vadd.f32 %v514, %v518
  %v523 = vadd.f32 %v515, %v519
  %v524 = vadd.f32 %v516, %v520
  %v525 = vadd.f32 %v395, %v521
  %v526 = vadd.f32 %v396, %v522
  %v527 = vadd.f32 %v397, %v523
  %v528 = vadd.f32 %v398, %v524
  %529 = vst [vmem:[%s2] sm:$0xff] %v509
  %530 = vst [vmem:[%s2 + $0x8] sm:$0xff] %v510
  %531 = vst [vmem:[%s2 + $0x10] sm:$0xff] %v511
  %532 = vst [vmem:[%s2 + $0x18] sm:$0xff] %v512
  %s533 = scalar_lea.vmem %s2, 32
  %534 = vst [vmem:[%s533] sm:$0xff] %v525
  %535 = vst [vmem:[%s533 + $0x8] sm:$0xff] %v526
  %536 = vst [vmem:[%s533 + $0x10] sm:$0xff] %v527
  %537 = vst [vmem:[%s533 + $0x18] sm:$0xff] %v528
  // Predicated region
  $region10: #{koopman_operator2d_forward.1} parent=0 // pred_check
    _
  $region11: #{koopman_operator2d_forward.1} parent=0 // pred_check_branch
    %539 = sbr.rel (0) target = $region13
  $region12: #{koopman_operator2d_forward.1} parent=0 // pred_region
    _
  $region13: #{koopman_operator2d_forward.1} parent=0 // pred_fallthru
    _
  // Predicated region
  $region14: #{koopman_operator2d_forward.1} parent=0 // pred_check
    _
  $region15: #{koopman_operator2d_forward.1} parent=0 // pred_check_branch
    %541 = sbr.rel (0) target = $region17
  $region16: #{koopman_operator2d_forward.1} parent=0 // pred_region
    _
  $region17: #{koopman_operator2d_forward.1} parent=0 // pred_fallthru
    _

</llo_original>
